<compile_context>
chip_gen: v6e
topology: v6e:2x2x1
jax: 0.10.0
libtpu: 0.0.40
codegen_flags: <defaults>
</compile_context>

<pallas_src>
import jax
import jax.numpy as jnp
from jax import lax
from jax.experimental import pallas as pl
from jax.experimental.pallas import tpu as pltpu


LANES = 128                          # lane-dense width (multiple of 128)
CHUNK_ROWS = 1024                    # 1024 x 128 f32 = 512 KiB compute chunk
SUM_TILE_BYTES = 8 * 1024 * 1024     # per-input-buffer DMA tile (reduction)
ADD_TILE_BYTES = 4 * 1024 * 1024     # per-buffer DMA tile (elementwise add)
VMEM_LIMIT = 48 * 1024 * 1024        # explicit scoped-VMEM cap (< 64 MiB on v7x)
NUM_PARTIALS = 2                     # per-core partial sums (v7x has 2 TCs)


# ------------------------- layout helper -------------------------

def _lane_dense_2d(x):
    """Flatten x to a lane-dense (rows, LANES) view.

    The reshape is layout plumbing only; padding happens only in the rare case
    x.size % LANES != 0 (zeros, safe for the sum)."""
    flat = x.reshape(-1)
    n = flat.shape[0]
    rows = pl.cdiv(max(n, 1), LANES)
    padded = rows * LANES
    if padded != n:
        # TODO(synk): rare fallback; costs one extra HBM pass via jnp.pad.
        flat = jnp.pad(flat, (0, padded - n))
    return flat.reshape(rows, LANES)


# ------------------------- forward: x + total -------------------------

def _add_total_kernel(total_ref, x_ref, o_ref):
    # total_ref: SMEM f32 scalar (shape (1,)); x_ref / o_ref: VMEM tiles.
    # Add in f32 (torch opmath for low-precision dtypes), cast back on store.
    # OOB rows of a partial last tile compute garbage but are never written
    # back by the pipeline, so no mask is needed here.
    o_ref[...] = (x_ref[...].astype(jnp.float32) + total_ref[0]).astype(o_ref.dtype)


def pallas_add_total(x, total):
    """forward(x) = x + total (tiled, HBM-bandwidth-bound elementwise add)."""
    orig_shape = x.shape
    n = x.size
    x2d = _lane_dense_2d(x)
    rows = x2d.shape[0]
    itemsize = jnp.dtype(x2d.dtype).itemsize

    # dtype-aware byte budget; tile rows are a multiple of 8 or the full dim.
    budget_rows = max(8, (ADD_TILE_BYTES // (LANES * itemsize)) // 8 * 8)
    tile_rows = rows if rows <= budget_rows else budget_rows
    num_tiles = pl.cdiv(rows, tile_rows)

    total_arr = jnp.asarray(total, dtype=jnp.float32).reshape((1,))

    # NOTE: with caller-side donation and no pad path, input_output_aliases
    # ={1: 0} would drop the extra output allocation; left off to avoid
    # aliasing a caller-visible buffer.
    out2d = pl.pallas_call(
        _add_total_kernel,
        out_shape=jax.ShapeDtypeStruct((rows, LANES), x.dtype),
        grid=(num_tiles,),
        in_specs=[
            pl.BlockSpec(memory_space=pltpu.MemorySpace.SMEM),    # scalar total
            pl.BlockSpec((tile_rows, LANES), lambda i: (i, 0)),   # x tile
        ],
        out_specs=pl.BlockSpec((tile_rows, LANES), lambda i: (i, 0)),
        compiler_params=pltpu.CompilerParams(
            dimension_semantics=("parallel",),
            vmem_limit_bytes=VMEM_LIMIT),
    )(total_arr, x2d)

    flat_out = out2d.reshape(-1)
    if flat_out.shape[0] != n:
        flat_out = flat_out[:n]
    return flat_out.reshape(orig_shape)


# ------------------------- calculate_stats: x.sum() -------------------------

def _small_sum_kernel(x_ref, o_ref):
    # Tiny-input path: the whole (rows, LANES) array fits in VMEM; one pass.
    o_ref[...] = jnp.sum(x_ref[...].astype(jnp.float32), axis=0, keepdims=True)


def _make_partial_sum_kernel(tile_rows, rows_total, tiles_per_part, chunk_rows,
                             needs_mask):
    """Per-partial reduction kernel.

    Output block (8, LANES) f32 stays resident across the inner ('arbitrary')
    grid axis; an inner fori_loop reduces the DMA tile in 512 KiB chunks with
    a sublane-aligned halving tree, keeping f32 intermediates small."""
    n_chunks = tile_rows // chunk_rows

    def kernel(x_ref, acc_ref):
        c = pl.program_id(0)
        i = pl.program_id(1)

        @pl.when(i == 0)
        def _():
            acc_ref[...] = jnp.zeros_like(acc_ref)

        tile_row0 = (c * tiles_per_part + i) * tile_rows

        def chunk_body(j, acc):
            r0 = pl.multiple_of(j * chunk_rows, chunk_rows)
            xc = x_ref[pl.ds(r0, chunk_rows), :].astype(jnp.float32)
            if needs_mask:
                grow = (tile_row0 + j * chunk_rows
                        + lax.broadcasted_iota(jnp.int32, (chunk_rows, LANES), 0))
                xc = jnp.where(grow < rows_total, xc, 0.0)
            # Halving tree down to 8 rows: static, sublane-aligned slices and
            # pure VALU adds (no XLU in the hot loop).
            r = chunk_rows
            while r > 8:
                r //= 2
                xc = xc[:r, :] + xc[r:2 * r, :]
            return acc + xc

        acc_ref[...] += lax.fori_loop(
            0, n_chunks, chunk_body, jnp.zeros((8, LANES), jnp.float32))

    return kernel


def pallas_calculate_stats(x):
    """calculate_stats(x) = x.sum(), f32 accumulation."""
    x2d = _lane_dense_2d(x)
    rows = x2d.shape[0]
    itemsize = jnp.dtype(x2d.dtype).itemsize

    if rows < CHUNK_ROWS:
        # Tiny input (< 512 KiB f32): single un-tiled pass, reduce in XLA.
        part = pl.pallas_call(
            _small_sum_kernel,
            out_shape=jax.ShapeDtypeStruct((1, LANES), jnp.float32),
            compiler_params=pltpu.CompilerParams(vmem_limit_bytes=VMEM_LIMIT),
        )(x2d)
        return jnp.sum(part)

    # dtype-aware byte budget; tile rows are a multiple of CHUNK_ROWS.
    budget_rows = max(
        CHUNK_ROWS,
        (SUM_TILE_BYTES // (LANES * itemsize)) // CHUNK_ROWS * CHUNK_ROWS)
    tile_rows = min(budget_rows, (rows // CHUNK_ROWS) * CHUNK_ROWS)
    num_tiles = pl.cdiv(rows, tile_rows)
    num_partials = min(NUM_PARTIALS, num_tiles)
    tiles_per_part = pl.cdiv(num_tiles, num_partials)
    needs_mask = (rows % tile_rows != 0) or (num_partials * tiles_per_part != num_tiles)

    kernel = _make_partial_sum_kernel(
        tile_rows, rows, tiles_per_part, CHUNK_ROWS, needs_mask)

    def x_index(c, i):
        # Clamp so rounded-up (c, i) combos re-read the last tile; their
        # contribution is masked to zero in-kernel.
        t = c * tiles_per_part + i
        return (jnp.minimum(t, num_tiles - 1), 0)

    parts = pl.pallas_call(
        kernel,
        out_shape=jax.ShapeDtypeStruct((num_partials * 8, LANES), jnp.float32),
        grid=(num_partials, tiles_per_part),
        in_specs=[pl.BlockSpec((tile_rows, LANES), x_index)],
        out_specs=pl.BlockSpec((8, LANES), lambda c, i: (c, 0)),
        compiler_params=pltpu.CompilerParams(
            dimension_semantics=("parallel", "arbitrary"),
            vmem_limit_bytes=VMEM_LIMIT),
    )(x2d)
    return jnp.sum(parts)


# ------------------------- module port -------------------------

class TotalAdder:
    """JAX/Pallas port of the PyTorch TotalAdder module."""

    def __init__(self):
        # register_buffer('total', torch.tensor(0.0)) -> f32 scalar 0.0
        self.total = jnp.float32(0.0)

    def calculate_stats(self, x):
        return pallas_calculate_stats(x)

    def combine_stats(self, stats):
        # torch.stack(stats).sum() — tiny glue, plain JAX.
        return jnp.sum(jnp.stack(stats))

    def apply_stats(self, stats):
        self.total = stats

    def forward(self, x):
        return pallas_add_total(x, self.total)


# ------------------------- demo / check -------------------------

if __name__ == "__main__":
    key = jax.random.PRNGKey(0)
    x = jax.random.normal(key, (2, 4, 16, 16), dtype=jnp.float32)

    module = TotalAdder()

    # forward with the freshly-initialized buffer (total == 0.0)
    out0 = module.forward(x)
    jax.block_until_ready(out0)
    assert out0.shape == x.shape and out0.dtype == x.dtype
    assert jnp.allclose(out0, x, atol=1e-6)

    # exercise the stats plan: calculate -> combine -> apply -> forward
    s = module.calculate_stats(x)
    combined = module.combine_stats([s, s])
    module.apply_stats(combined)
    out1 = module.forward(x)
    jax.block_until_ready(out1)

    ref_total = 2.0 * jnp.sum(x)
    tol_total = 2e-5 * float(jnp.sum(jnp.abs(x))) + 1e-3
    assert abs(float(module.total) - float(ref_total)) <= tol_total
    assert jnp.allclose(out1, x + module.total, rtol=1e-6, atol=1e-5)

    # exercise the tiled, two-partial reduction path (partial last tile + mask)
    x_big = jax.random.normal(jax.random.PRNGKey(1), (4, 64, 48, 48),
                              dtype=jnp.float32)
    s_big = pallas_calculate_stats(x_big)
    jax.block_until_ready(s_big)
    ref_big = jnp.sum(x_big)
    tol_big = 2e-5 * float(jnp.sum(jnp.abs(x_big))) + 1e-2
    assert abs(float(s_big) - float(ref_big)) <= tol_big
    out_big = pallas_add_total(x_big, s_big)
    jax.block_until_ready(out_big)
    assert jnp.allclose(out_big, x_big + s_big, rtol=1e-6, atol=1e-4)

    print("KERNEL_OK")
</pallas_src>

<mosaic_0001>
module attributes {stable_mosaic.version = 11 : i64} {
  func.func @_add_total_kernel(%arg0: i32, %arg1: memref<1xf32, #tpu.memory_space<smem>>, %arg2: memref<16x128xf32, #tpu.memory_space<vmem>>, %arg3: memref<16x128xf32, #tpu.memory_space<vmem>>) attributes {dimension_semantics = [#tpu.dimension_semantics<parallel>], iteration_bounds = array<i64: 1>, scalar_prefetch = 0 : i64, scratch_operands = 0 : i64, tpu.core_type = #tpu.core_type<tc>, window_params = [{transform_indices = @transform_0, window_bounds = array<i64: 1>}, {transform_indices = @transform_1, window_bounds = array<i64: 16, 128>}, {transform_indices = @transform_2, window_bounds = array<i64: 16, 128>}]} {
    %c0 = arith.constant 0 : index
    %c0_0 = arith.constant 0 : index
    %0 = vector.load %arg2[%c0, %c0_0] : memref<16x128xf32, #tpu.memory_space<vmem>>, vector<16x128xf32>
    %c0_1 = arith.constant 0 : index
    %1 = memref.load %arg1[%c0_1] : memref<1xf32, #tpu.memory_space<smem>>
    %2 = vector.broadcast %1 : f32 to vector<16x128xf32>
    %3 = arith.addf %0, %2 : vector<16x128xf32>
    %c0_2 = arith.constant 0 : index
    %c0_3 = arith.constant 0 : index
    %4 = vector.load %arg3[%c0_2, %c0_3] : memref<16x128xf32, #tpu.memory_space<vmem>>, vector<16x128xf32>
    tpu.vector_store %arg3[%c0_2, %c0_3], %3 {strides = array<i32>} : memref<16x128xf32, #tpu.memory_space<vmem>>, vector<16x128xf32>,
    return
  }
  func.func @transform_0(%arg0: i32) -> i32 {
    %c0_i32 = arith.constant 0 : i32
    %c0_i32_0 = arith.constant 0 : i32
    return %c0_i32 : i32
  }
  func.func @transform_1(%arg0: i32) -> (i32, i32) {
    %c0_i32 = arith.constant 0 : i32
    %c0_i32_0 = arith.constant 0 : i32
    return %arg0, %c0_i32 : i32, i32
  }
  func.func @transform_2(%arg0: i32) -> (i32, i32) {
    %c0_i32 = arith.constant 0 : i32
    %c0_i32_0 = arith.constant 0 : i32
    return %arg0, %c0_i32 : i32, i32
  }
}

</mosaic_0001>

<llo_original>
// kernel: tpu_custom_call.1
$region0: #{tpu_custom_call.1}
  #allocation0 [shape = 'u32[]', space=smem, size = 0x4, offset = 0x4, fixed_abs, tag = 'smem constant byte address 0x4 - core index']
  #allocation1 [shape = 'u32[144,128]{1,0:T(1,128)}', space=vmem, size = 0x12000, scoped, tag = 'internal scratch']
  #allocation2 [shape = 'f32[1]{0:T(128)S(6)}', space=smem, size = 0x200, scoped, tag = 'scoped memory for tpu_custom_call.1']
  %s0 = inlined_call_operand.<no memory space> [shape: f32[1], index: 0, kind: input, shape index: {}]
  %s1 = inlined_call_operand.hbm [shape: f32[16,128], index: 1, kind: input, shape index: {}]
  %s2 = inlined_call_operand.hbm [shape: f32[16,128], index: 2, kind: output, shape index: {}]
  %s3 = sld [smem:[#allocation0]]
  $region22: #{tpu_custom_call.1} parent=0
    _
  %s5 = ssub.s32 1, %s3
  %s6 = scalar_select 0, %s5, %s3
  %7 = sst [smem:[#allocation2]] %s0
  $region1: #{tpu_custom_call.1} parent=0
    #allocation3 [shape = 'u8[8192]{0}', space=vmem, size = 0x2000, scoped, tag = 'input window, operand 1, single buffered']
    #allocation4 [shape = 's32[1]{0}', space=sflag, size = 0x4, scoped, tag = 'scoped memory for tpu_custom_call.1']
    #allocation5 [shape = 's32[1]{0}', space=sflag, size = 0x4, scoped, tag = 'scoped memory for tpu_custom_call.1']
    #allocation6 [shape = 'u8[8192]{0}', space=vmem, size = 0x2000, scoped, tag = 'output window, operand 0, single buffered']
    %8 = vsyncpa [#allocation4], 0
    %9 = vsyncpa [#allocation5], 0
    // Predicated region
    $region2: #{tpu_custom_call.1} parent=1 // pred_check
      _
    $region3: #{tpu_custom_call.1} parent=1 // pred_check_branch
      %11 = sbr.rel (0) target = $region5
    $region4: #{tpu_custom_call.1} parent=1 // pred_region
      _
    $region5: #{tpu_custom_call.1} parent=1 // pred_fallthru
      _
    // Predicated region
    $region6: #{tpu_custom_call.1} parent=1 // pred_check
      _
    $region7: #{tpu_custom_call.1} parent=1 // pred_check_branch
      %13 = sbr.rel (0) target = $region9
    $region8: #{tpu_custom_call.1} parent=1 // pred_region
      %s15 = ssub.s32 256, 256
      %16 = vsyncadd [#allocation4], %s15
      %s17 = sshll.u32 [#allocation3], 4
      %s18 = int_to_ptr.vmem [resolvable:$true] %s17
      %23 = dma.hbm_to_vmem [thread:$0]  %s1, 256, %s18, [#allocation4], 128, 128, 8
    $region9: #{tpu_custom_call.1} parent=1 // pred_fallthru
      _
    // Predicated region
    $region10: #{tpu_custom_call.1} parent=1 // pred_check
      _
    $region11: #{tpu_custom_call.1} parent=1 // pred_check_branch
      %25 = sbr.rel (0) target = $region13
    $region12: #{tpu_custom_call.1} parent=1 // pred_region
      %26 = dma.done [#allocation4], 256
    $region13: #{tpu_custom_call.1} parent=1 // pred_fallthru
      _
    %v27 = vld [vmem:[#allocation3] sm:$0xff]
    %v28 = vld [vmem:[#allocation3 + $0x8] sm:$0xff]
    %s29 = sld [smem:[#allocation2]]
    %v30 = vstv %s29
    %v31 = vadd.f32 %v27, %v30
    %v32 = vadd.f32 %v28, %v30
    %33 = vst [vmem:[#allocation6] sm:$0xff] %v31
    %34 = vst [vmem:[#allocation6 + $0x8] sm:$0xff] %v32
    // Predicated region
    $region14: #{tpu_custom_call.1} parent=1 // pred_check
      _
    $region15: #{tpu_custom_call.1} parent=1 // pred_check_branch
      %36 = sbr.rel (0) target = $region17
    $region16: #{tpu_custom_call.1} parent=1 // pred_region
      %s38 = ssub.s32 256, 256
      %39 = vsyncadd [#allocation5], %s38
      %s40 = sshll.u32 [#allocation6], 4
      %s41 = int_to_ptr.vmem [resolvable:$true] %s40
      %46 = dma.vmem_to_hbm [thread:$0]  %s41, 256, %s2, [#allocation5], 128, 128, 8
    $region17: #{tpu_custom_call.1} parent=1 // pred_fallthru
      _
    // Predicated region
    $region18: #{tpu_custom_call.1} parent=1 // pred_check
      _
    $region19: #{tpu_custom_call.1} parent=1 // pred_check_branch
      %48 = sbr.rel (0) target = $region21
    $region20: #{tpu_custom_call.1} parent=1 // pred_region
      %49 = dma.done [#allocation5], 256
    $region21: #{tpu_custom_call.1} parent=1 // pred_fallthru
      _
    %50 = vsyncpa [#allocation4], 1
    %51 = vsyncpa [#allocation5], 1

</llo_original>
